<compile_context>
chip_gen: v5e
topology: v5e:2x2
jax: 0.10.0
libtpu: 0.0.40
codegen_flags: <defaults>
</compile_context>

<pallas_src>
import functools

import jax
import jax.numpy as jnp
from jax import lax
from jax.experimental import pallas as pl
from jax.experimental.pallas import tpu as pltpu


def _round_up(x, m):
    return (x + m - 1) // m * m


def _encoder_matmul_kernel(x_ref, w_ref, o_ref, acc_ref):
    """Compute one (tm, tn) output tile.

    x_ref: (tm, tk) bf16, w_ref: (tn, tk) bf16 (PyTorch (out, in) layout),
    o_ref: (tm, tn) bf16, acc_ref: (tm, tn) f32 scratch (resident across K steps).
    """

    @pl.when(pl.program_id(2) == 0)
    def _():
        acc_ref[...] = jnp.zeros_like(acc_ref)

    # Contract the last (K) dim of both operands: x (tm,tk) . w(tn,tk)^T -> (tm,tn).
    acc_ref[...] += lax.dot_general(
        x_ref[...],
        w_ref[...],
        dimension_numbers=(((1,), (1,)), ((), ())),
        preferred_element_type=jnp.float32,
    )

    @pl.when(pl.program_id(2) == pl.num_programs(2) - 1)
    def _():
        o_ref[...] = acc_ref[...].astype(o_ref.dtype)


@jax.jit
def encoder_forward(x, weight):
    """Equivalent of `Encoder.forward`: out = x @ weight.T (no bias), bf16.

    x:      (..., input_dim)         bf16
    weight: (output_dim, input_dim)  bf16 (PyTorch nn.Linear layout, NOT transposed)
    """
    *lead, k = x.shape
    n, k_w = weight.shape
    assert k == k_w, "input_dim mismatch between x and weight"

    m = 1
    for d in lead:
        m *= d
    m = max(m, 1)

    # --- tile selection -----------------------------------------------------
    # tm: sublane tile for activations/output (multiple of 16 for bf16 packing).
    # tn: lane-dense output tile (multiple of 128 -> unmasked vector stores).
    # tk: keep K whole while it comfortably fits VMEM, otherwise tile it.
    tm = min(512, _round_up(m, 16))
    tn = min(512, _round_up(n, 128))
    tk = k if k <= 2048 else 2048

    mp = _round_up(m, tm)
    np_ = _round_up(n, tn)
    kp = _round_up(k, tk)

    x2d = x.reshape(m, k)
    if (mp, kp) != (m, k):
        x2d = jnp.pad(x2d, ((0, mp - m), (0, kp - k)))
    w = weight
    if (np_, kp) != (n, k):
        w = jnp.pad(w, ((0, np_ - n), (0, kp - k)))

    grid = (mp // tm, np_ // tn, kp // tk)

    cost = pl.CostEstimate(
        flops=2 * m * n * k,
        transcendentals=0,
        bytes_accessed=2 * (m * k + n * k + m * n),  # bf16 = 2 bytes/elem
    )

    out2d = pl.pallas_call(
        _encoder_matmul_kernel,
        out_shape=jax.ShapeDtypeStruct((mp, np_), x.dtype),
        grid_spec=pltpu.PrefetchScalarGridSpec(
            num_scalar_prefetch=0,
            grid=grid,
            in_specs=[
                pl.BlockSpec((tm, tk), lambda i, j, kk: (i, kk)),   # activations
                pl.BlockSpec((tn, tk), lambda i, j, kk: (j, kk)),   # weight (out, in)
            ],
            out_specs=pl.BlockSpec((tm, tn), lambda i, j, kk: (i, j)),
            scratch_shapes=[pltpu.VMEM((tm, tn), jnp.float32)],
        ),
        compiler_params=pltpu.CompilerParams(
            dimension_semantics=("parallel", "parallel", "arbitrary"),
        ),
        cost_estimate=cost,
    )(x2d, w)

    if (mp, np_) != (m, n):
        out2d = out2d[:m, :n]
    return out2d.reshape(*lead, n)


if __name__ == "__main__":
    # Small shapes consistent with the module: batch=2, seq=8, input_dim=32, output_dim=64.
    batch, seq, input_dim, output_dim = 2, 8, 32, 64

    key = jax.random.PRNGKey(0)
    kx, kw = jax.random.split(key)

    x = jax.random.normal(kx, (batch, seq, input_dim), dtype=jnp.float32).astype(jnp.bfloat16)

    # Deterministic init mimicking nn.Linear: U(-1/sqrt(in), 1/sqrt(in)), stored (out, in) in bf16.
    bound = 1.0 / (input_dim ** 0.5)
    weight = jax.random.uniform(
        kw, (output_dim, input_dim), minval=-bound, maxval=bound, dtype=jnp.float32
    ).astype(jnp.bfloat16)

    out = encoder_forward(x, weight)
    jax.block_until_ready(out)

    # Reference check (plain JAX): x @ W.T in f32, cast to bf16.
    ref = jnp.dot(
        x.astype(jnp.float32), weight.T.astype(jnp.float32)
    ).astype(jnp.bfloat16)
    assert out.shape == (batch, seq, output_dim)
    assert out.dtype == jnp.bfloat16
    assert jnp.allclose(out.astype(jnp.float32), ref.astype(jnp.float32), atol=1e-1, rtol=1e-1)

    print("KERNEL_OK")
</pallas_src>

<mosaic_0001>
module attributes {stable_mosaic.version = 11 : i64} {
  func.func @_encoder_matmul_kernel(%arg0: i32, %arg1: i32, %arg2: i32, %arg3: memref<16x32xbf16, #tpu.memory_space<vmem>>, %arg4: memref<128x32xbf16, #tpu.memory_space<vmem>>, %arg5: memref<16x128xbf16, #tpu.memory_space<vmem>>, %arg6: memref<16x128xf32, #tpu.memory_space<vmem>>) attributes {dimension_semantics = [#tpu.dimension_semantics<parallel>, #tpu.dimension_semantics<parallel>, #tpu.dimension_semantics<arbitrary>], iteration_bounds = array<i64: 1, 1, 1>, scalar_prefetch = 0 : i64, scratch_operands = 1 : i64, tpu.core_type = #tpu.core_type<tc>, window_params = [{transform_indices = @transform_0, window_bounds = array<i64: 16, 32>}, {transform_indices = @transform_1, window_bounds = array<i64: 128, 32>}, {transform_indices = @transform_2, window_bounds = array<i64: 16, 128>}]} {
    %c0_i32 = arith.constant 0 : i32
    %0 = arith.cmpi eq, %arg2, %c0_i32 : i32
    %1 = arith.extui %0 : i1 to i32
    %c0_i32_0 = arith.constant 0 : i32
    %2 = arith.cmpi ne, %1, %c0_i32_0 : i32
    scf.if %2 {
      %cst_10 = arith.constant 0.000000e+00 : f32
      %12 = vector.broadcast %cst_10 : f32 to vector<16x128xf32>
      %c0_11 = arith.constant 0 : index
      %c0_12 = arith.constant 0 : index
      %13 = vector.load %arg6[%c0_11, %c0_12] : memref<16x128xf32, #tpu.memory_space<vmem>>, vector<16x128xf32>
      tpu.vector_store %arg6[%c0_11, %c0_12], %12 {strides = array<i32>} : memref<16x128xf32, #tpu.memory_space<vmem>>, vector<16x128xf32>,
    } else {
    }
    %c0 = arith.constant 0 : index
    %c0_1 = arith.constant 0 : index
    %3 = vector.load %arg6[%c0, %c0_1] : memref<16x128xf32, #tpu.memory_space<vmem>>, vector<16x128xf32>
    %c0_2 = arith.constant 0 : index
    %c0_3 = arith.constant 0 : index
    %4 = vector.load %arg3[%c0_2, %c0_3] : memref<16x32xbf16, #tpu.memory_space<vmem>>, vector<16x32xbf16>
    %c0_4 = arith.constant 0 : index
    %c0_5 = arith.constant 0 : index
    %5 = vector.load %arg4[%c0_4, %c0_5] : memref<128x32xbf16, #tpu.memory_space<vmem>>, vector<128x32xbf16>
    %cst = arith.constant dense<0.000000e+00> : vector<16x128xf32>
    %6 = tpu.matmul %4, %5, %cst {dimension_numbers = #tpu.dot_dimension_numbers<[1], [1], [0], [0], [0, 0, 1, 0], [], []>} : vector<16x32xbf16>, vector<128x32xbf16>, vector<16x128xf32> -> vector<16x128xf32>
    %7 = arith.addf %3, %6 : vector<16x128xf32>
    %c0_6 = arith.constant 0 : index
    %c0_7 = arith.constant 0 : index
    %8 = vector.load %arg6[%c0_6, %c0_7] : memref<16x128xf32, #tpu.memory_space<vmem>>, vector<16x128xf32>
    tpu.vector_store %arg6[%c0_6, %c0_7], %7 {strides = array<i32>} : memref<16x128xf32, #tpu.memory_space<vmem>>, vector<16x128xf32>,
    %c0_i32_8 = arith.constant 0 : i32
    %9 = arith.cmpi eq, %arg2, %c0_i32_8 : i32
    %10 = arith.extui %9 : i1 to i32
    %c0_i32_9 = arith.constant 0 : i32
    %11 = arith.cmpi ne, %10, %c0_i32_9 : i32
    scf.if %11 {
      %c0_10 = arith.constant 0 : index
      %c0_11 = arith.constant 0 : index
      %12 = vector.load %arg6[%c0_10, %c0_11] : memref<16x128xf32, #tpu.memory_space<vmem>>, vector<16x128xf32>
      %13 = arith.truncf %12 : vector<16x128xf32> to vector<16x128xbf16>
      %c0_12 = arith.constant 0 : index
      %c0_13 = arith.constant 0 : index
      %14 = vector.load %arg5[%c0_12, %c0_13] : memref<16x128xbf16, #tpu.memory_space<vmem>>, vector<16x128xbf16>
      tpu.vector_store %arg5[%c0_12, %c0_13], %13 {strides = array<i32>} : memref<16x128xbf16, #tpu.memory_space<vmem>>, vector<16x128xbf16>,
    } else {
    }
    return
  }
  func.func @transform_0(%arg0: i32, %arg1: i32, %arg2: i32) -> (i32, i32) {
    %c0_i32 = arith.constant 0 : i32
    return %arg0, %arg2 : i32, i32
  }
  func.func @transform_1(%arg0: i32, %arg1: i32, %arg2: i32) -> (i32, i32) {
    %c0_i32 = arith.constant 0 : i32
    return %arg1, %arg2 : i32, i32
  }
  func.func @transform_2(%arg0: i32, %arg1: i32, %arg2: i32) -> (i32, i32) {
    %c0_i32 = arith.constant 0 : i32
    return %arg0, %arg1 : i32, i32
  }
}

</mosaic_0001>

<llo_original>
// kernel: encoder_forward.1
$region0: #{encoder_forward.1}
  #allocation0 [shape = 'u32[]', space=smem, size = 0x4, offset = 0x4, fixed_abs, tag = 'smem constant byte address 0x4 - core index']
  #allocation1 [shape = 'u32[72,128]{1,0:T(1,128)}', space=vmem, size = 0x9000, scoped, tag = 'internal scratch']
  #allocation2 [shape = 'f32[16,128]{1,0:T(8,128)}', space=vmem, size = 0x2000, scoped, tag = 'scratch operand']
  %s0 = inlined_call_operand.vmem [shape: bf16[16,32], index: 0, kind: input, shape index: {}]
  %s1 = inlined_call_operand.vmem [shape: bf16[128,32], index: 1, kind: input, shape index: {}]
  %s2 = inlined_call_operand.vmem [shape: bf16[16,128], index: 2, kind: output, shape index: {}]
  %s3 = sld [smem:[#allocation0]]
  $region26: #{encoder_forward.1} parent=0
    _
  %s5 = ssub.s32 1, %s3
  %s6 = scalar_select 0, %s5, %s3
  // Predicated region
  $region2: #{encoder_forward.1} parent=0 // pred_check
    _
  $region3: #{encoder_forward.1} parent=0 // pred_check_branch
    %8 = sbr.rel (0) target = $region5
  $region4: #{encoder_forward.1} parent=0 // pred_region
    _
  $region5: #{encoder_forward.1} parent=0 // pred_fallthru
    _
  // Predicated region
  $region6: #{encoder_forward.1} parent=0 // pred_check
    _
  $region7: #{encoder_forward.1} parent=0 // pred_check_branch
    %10 = sbr.rel (0) target = $region9
  $region8: #{encoder_forward.1} parent=0 // pred_region
    _
  $region9: #{encoder_forward.1} parent=0 // pred_fallthru
    _
  %p11 = scmp.eq.s32.totalorder 0, 0
  // Predicated region
  $region10: #{encoder_forward.1} parent=0 // pred_check
    %p12 = pneg %p11
  $region11: #{encoder_forward.1} parent=0 // pred_check_branch
    %14 = sbr.rel (%p12) target = $region13
  $region12: #{encoder_forward.1} parent=0 // pred_region
    %15 = vst [vmem:[#allocation2] sm:$0xff] 0.0
    %16 = vst [vmem:[#allocation2 + $0x8] sm:$0xff] 0.0
  $region13: #{encoder_forward.1} parent=0 // pred_fallthru
    _
  %v17 = vld [vmem:[#allocation2] sm:$0xff]
  %v18 = vld [vmem:[#allocation2 + $0x8] sm:$0xff]
  %v19 = vld [vmem:[%s0] sm:$0xf]
  %v20 = vld [vmem:[%s0 + $0x4] sm:$0xf]
  %v21 = vld [vmem:[%s1] sm:$0xf]
  %v22 = vld [vmem:[%s1 + $0x4] sm:$0xf]
  %v23 = vld [vmem:[%s1 + $0x8] sm:$0xf]
  %v24 = vld [vmem:[%s1 + $0xc] sm:$0xf]
  %v25 = vld [vmem:[%s1 + $0x10] sm:$0xf]
  %v26 = vld [vmem:[%s1 + $0x14] sm:$0xf]
  %v27 = vld [vmem:[%s1 + $0x18] sm:$0xf]
  %v28 = vld [vmem:[%s1 + $0x1c] sm:$0xf]
  %v29 = vld [vmem:[%s1 + $0x20] sm:$0xf]
  %v30 = vld [vmem:[%s1 + $0x24] sm:$0xf]
  %v31 = vld [vmem:[%s1 + $0x28] sm:$0xf]
  %v32 = vld [vmem:[%s1 + $0x2c] sm:$0xf]
  %v33 = vld [vmem:[%s1 + $0x30] sm:$0xf]
  %v34 = vld [vmem:[%s1 + $0x34] sm:$0xf]
  %v35 = vld [vmem:[%s1 + $0x38] sm:$0xf]
  %v36 = vld [vmem:[%s1 + $0x3c] sm:$0xf]
  %v39 = vunpack.c.l.b16 %v19
  %v40 = vunpack.c.l.b16 %v20
  %v41 = vpack.c.b16 %v40, %v39
  %v58 = vunpack.c.l.b16 %v21
  %v59 = vunpack.c.l.b16 %v22
  %v60 = vunpack.c.l.b16 %v23
  %v61 = vunpack.c.l.b16 %v24
  %v62 = vunpack.c.l.b16 %v25
  %v63 = vunpack.c.l.b16 %v26
  %v64 = vunpack.c.l.b16 %v27
  %v65 = vunpack.c.l.b16 %v28
  %v66 = vunpack.c.l.b16 %v29
  %v67 = vunpack.c.l.b16 %v30
  %v68 = vunpack.c.l.b16 %v31
  %v69 = vunpack.c.l.b16 %v32
  %v70 = vunpack.c.l.b16 %v33
  %v71 = vunpack.c.l.b16 %v34
  %v72 = vunpack.c.l.b16 %v35
  %v73 = vunpack.c.l.b16 %v36
  %v74 = vpack.c.b16 %v59, %v58
  %v75 = vpack.c.b16 %v61, %v60
  %v76 = vpack.c.b16 %v63, %v62
  %v77 = vpack.c.b16 %v65, %v64
  %v78 = vpack.c.b16 %v67, %v66
  %v79 = vpack.c.b16 %v69, %v68
  %v80 = vpack.c.b16 %v71, %v70
  %v81 = vpack.c.b16 %v73, %v72
  %vm82 = vcmask 261120
  %v84 = vsel %vm82, %v41, 0
  %v87 = vsel %vm82, %v74, 0
  %v90 = vsel %vm82, %v75, 0
  %v93 = vsel %vm82, %v76, 0
  %v96 = vsel %vm82, %v77, 0
  %v99 = vsel %vm82, %v78, 0
  %v102 = vsel %vm82, %v79, 0
  %v105 = vsel %vm82, %v80, 0
  %v108 = vsel %vm82, %v81, 0
  %110 = vmatpush.bf16.xpose.msra.mxu0 %v108
  %111 = vmatpush.bf16.xpose.msra.mxu0 %v105
  %112 = vmatpush.bf16.xpose.msra.mxu0 %v102
  %113 = vmatpush.bf16.xpose.msra.mxu0 %v99
  %114 = vmatpush.bf16.xpose.msra.mxu0 %v96
  %115 = vmatpush.bf16.xpose.msra.mxu0 %v93
  %116 = vmatpush.bf16.xpose.msra.mxu0 %v90
  %117 = vmatpush.bf16.xpose.msra.mxu0 %v87
  %118 = vmatmul.bf16.gmra.mxu0 %v84
  %v119 = vpop.f32.mrf.mxu0
  %v120 = vadd.f32 0.0, %v119
  %v121 = vpop.f32.mrf.mxu0
  %v122 = vadd.f32 0.0, %v121
  %123 = vdwg.mxu0
  %v124 = vadd.f32 %v17, %v120
  %v125 = vadd.f32 %v18, %v122
  %126 = vst [vmem:[#allocation2] sm:$0xff] %v124
  %127 = vst [vmem:[#allocation2 + $0x8] sm:$0xff] %v125
  // Predicated region
  $region14: #{encoder_forward.1} parent=0 // pred_check
    %p128 = pneg %p11
  $region15: #{encoder_forward.1} parent=0 // pred_check_branch
    %130 = sbr.rel (%p128) target = $region17
  $region16: #{encoder_forward.1} parent=0 // pred_region
    %v131 = vld [vmem:[#allocation2] sm:$0xff]
    %v132 = vld [vmem:[#allocation2 + $0x8] sm:$0xff]
    %v133 = vpack.c.bf16 %v131, %v131
    %v134 = vpack.c.bf16 %v132, %v132
    %135 = vst [vmem:[%s2] sm:$0xf] %v133
    %136 = vst [vmem:[%s2 + $0x4] sm:$0xf] %v134
  $region17: #{encoder_forward.1} parent=0 // pred_fallthru
    _
  // Predicated region
  $region18: #{encoder_forward.1} parent=0 // pred_check
    _
  $region19: #{encoder_forward.1} parent=0 // pred_check_branch
    %138 = sbr.rel (0) target = $region21
  $region20: #{encoder_forward.1} parent=0 // pred_region
    _
  $region21: #{encoder_forward.1} parent=0 // pred_fallthru
    _
  // Predicated region
  $region22: #{encoder_forward.1} parent=0 // pred_check
    _
  $region23: #{encoder_forward.1} parent=0 // pred_check_branch
    %140 = sbr.rel (0) target = $region25
  $region24: #{encoder_forward.1} parent=0 // pred_region
    _
  $region25: #{encoder_forward.1} parent=0 // pred_fallthru
    _

</llo_original>
